<compile_context>
chip_gen: v7x
topology: tpu7x:2x2x1
jax: 0.10.0
libtpu: 0.0.40
codegen_flags: <defaults>
</compile_context>

<pallas_src>
import jax
import jax.numpy as jnp
import numpy as np
from jax.experimental import pallas as pl
from jax.experimental.pallas import tpu as pltpu

FC1_IN = 864                    # self.nchannels
FC1_OUT = int(864 // 0.88)      # == 981, nn.Linear(864, int(864 // 0.88))
POOL_HW = 7                     # nn.AvgPool2d(7) on a 7x7 map
SMALL_BATCH_MAX = 16            # regime switch (review: repeated weight only
                                # amortizes once several x tiles stream past it)


def _round_up(x, m):
    return ((x + m - 1) // m) * m


# --------------------------------------------------------------------------
# kernels
# --------------------------------------------------------------------------
def head_kernel_small(x_ref, w_ref, b_ref, out_ref):
    # x_ref  : (N, 49, 864) f32   channels on lanes, pool window on sublanes
    # w_ref  : (864, CP)    f32   fused (w1 @ w2) / 49   (pool scale folded)
    # b_ref  : (1, CP)      f32   fused  b1 @ w2 + b2
    # out_ref: (N, CP)      f32   lane-dense (CP = classNum padded to 128)
    pooled = jnp.sum(x_ref[...], axis=1)                 # sublane reduce -> (N, 864)
    out_ref[...] = (
        jnp.dot(pooled, w_ref[...], preferred_element_type=jnp.float32)
        + b_ref[...]
    )


def head_kernel_mxu(x_ref, w_ref, b_ref, out_ref):
    # x_ref  : (TB, 864*49) bf16  pure contiguous reshape of the NCHW feature map
    # w_ref  : (864*49, CP) bf16  fused weight (incl. 1/49), rows repeated 49x
    # b_ref  : (1, CP)      f32
    # out_ref: (TB, CP)     f32
    # Pooling is folded into this single MXU matmul (f32 accumulation).
    out_ref[...] = (
        jnp.dot(x_ref[...], w_ref[...], preferred_element_type=jnp.float32)
        + b_ref[...]
    )


# --------------------------------------------------------------------------
# wrappers
# --------------------------------------------------------------------------
def _fuse_head_params(w1, b1, w2, b2, hw, class_num, cp):
    # Offline algebraic fusion in f32 (valid: no activation between fc1/fc2,
    # dropout is identity).  Pool scale 1/hw folded in; class dim zero-padded
    # to a lane-dense cp.
    w_fused = (w1.astype(jnp.float32) @ w2.astype(jnp.float32)) * (1.0 / hw)
    b_fused = b1.astype(jnp.float32) @ w2.astype(jnp.float32) + b2.astype(jnp.float32)
    w_fused = jnp.pad(w_fused, ((0, 0), (0, cp - class_num)))
    b_fused = jnp.pad(b_fused, (0, cp - class_num)).reshape(1, cp)
    return w_fused, b_fused


def _head_small_batch(x_nchw, w_fused, b_fused, cp):
    N, C, H, W = x_nchw.shape
    hw = H * W
    # (N, C, HW) -> (N, HW, C): tiny wrapper-side transpose; puts channels on
    # the lane axis so the 49-deep pool reduce is a sublane reduce and the
    # pooled tile is already in MXU-LHS layout.  Full f32 (traffic is tiny).
    x = x_nchw.reshape(N, C, hw).transpose(0, 2, 1).astype(jnp.float32)

    flops = 2 * N * C * cp + N * hw * C
    bytes_accessed = x.size * 4 + w_fused.size * 4 + b_fused.size * 4 + N * cp * 4

    return pl.pallas_call(
        head_kernel_small,
        out_shape=jax.ShapeDtypeStruct((N, cp), jnp.float32),
        grid_spec=pltpu.PrefetchScalarGridSpec(
            num_scalar_prefetch=0,
            grid=(1,),
            in_specs=[
                pl.BlockSpec((N, hw, C), lambda i: (0, 0, 0)),
                pl.BlockSpec((C, cp), lambda i: (0, 0)),   # f32 fused weight
                pl.BlockSpec((1, cp), lambda i: (0, 0)),
            ],
            out_specs=pl.BlockSpec((N, cp), lambda i: (0, 0)),
        ),
        compiler_params=pltpu.CompilerParams(
            dimension_semantics=("arbitrary",),
            vmem_limit_bytes=32 * 1024 * 1024,
        ),
        cost_estimate=pl.CostEstimate(
            flops=flops, transcendentals=0, bytes_accessed=bytes_accessed),
    )(x, w_fused, b_fused)


def _head_large_batch(x_nchw, w_fused, b_fused, cp, *, batch_tile, core_parallel):
    N, C, H, W = x_nchw.shape
    hw = H * W
    k = C * hw  # 42336

    # Pool on the MXU: contiguous flatten of NCHW to (N, C*HW) in bf16, and the
    # fused weight row-repeated 49x so  x_flat @ w_rep == pooled @ w_fused.
    # TODO(synk): in the full model the backbone would emit this bf16 activation
    # directly; here the cast/reshape is a one-off wrapper-side XLA op.
    x = x_nchw.reshape(N, k).astype(jnp.bfloat16)
    w_rep = jnp.repeat(w_fused, hw, axis=0).astype(jnp.bfloat16)   # (42336, cp)

    tb = _round_up(max(8, min(batch_tile, N)), 8)
    num_tiles = pl.cdiv(N, tb)   # no wrapper-side batch pad: ragged last tile is
                                 # handled by Pallas block-boundary masking and
                                 # the extra rows are sliced off by the caller.

    flops = 2 * N * k * cp
    bytes_accessed = N * k * 2 + w_rep.size * 2 + b_fused.size * 4 + N * cp * 4

    if core_parallel and num_tiles >= 2:
        sem = (pltpu.CORE_PARALLEL,)     # v7x: shard batch tiles across both TCs
    else:
        sem = ("parallel",)

    return pl.pallas_call(
        head_kernel_mxu,
        out_shape=jax.ShapeDtypeStruct((N, cp), jnp.float32),
        grid_spec=pltpu.PrefetchScalarGridSpec(
            num_scalar_prefetch=0,
            grid=(num_tiles,),
            in_specs=[
                pl.BlockSpec((tb, k), lambda i: (i, 0)),   # streamed x tiles
                pl.BlockSpec((k, cp), lambda i: (0, 0)),   # VMEM-resident weight
                pl.BlockSpec((1, cp), lambda i: (0, 0)),
            ],
            out_specs=pl.BlockSpec((tb, cp), lambda i: (i, 0)),
        ),
        compiler_params=pltpu.CompilerParams(
            dimension_semantics=sem,
            # tb=64: 2 x ~5.2 MiB bf16 x-buffers + <= 2 x 10.4 MiB repeated
            # weight + tiny out  ~= 32 MiB  -> fits v5e/v6e scoped raises and
            # v7x's 64 MiB physical VMEM with headroom.
            vmem_limit_bytes=48 * 1024 * 1024,
        ),
        cost_estimate=pl.CostEstimate(
            flops=flops, transcendentals=0, bytes_accessed=bytes_accessed),
    )(x, w_rep, b_fused)


def micronet_m2_head(x_nchw, w1, b1, w2, b2, *, droprate_fc=0.0, training=False,
                     batch_tile=64, core_parallel=False):
    """Classifier head of MicroNet_M2 on the (N, 864, 7, 7) feature map."""
    if droprate_fc > 0.0 and training:
        # The algebraic fc1/fc2 fusion is only valid when dropout is identity.
        raise NotImplementedError(
            "fused fc1/fc2 head requires droprate_fc == 0 or eval mode")

    N, C, H, W = x_nchw.shape
    assert C == FC1_IN and H == POOL_HW and W == POOL_HW
    class_num = w2.shape[1]
    hw = H * W
    cp = _round_up(max(class_num, 1), 128)   # lane-dense output columns

    w_fused, b_fused = _fuse_head_params(w1, b1, w2, b2, hw, class_num, cp)

    if N <= SMALL_BATCH_MAX:
        out = _head_small_batch(x_nchw, w_fused, b_fused, cp)
    else:
        out = _head_large_batch(x_nchw, w_fused, b_fused, cp,
                                batch_tile=batch_tile,
                                core_parallel=core_parallel)
    return out[:N, :class_num]


# --------------------------------------------------------------------------
# params / reference / demo
# --------------------------------------------------------------------------
def init_head_params(key, class_num):
    # nn.Linear-style init (U(-1/sqrt(fan_in), +1/sqrt(fan_in))); biases zeroed
    # as in MicroNet_M2.__init__.  Weights stored transposed (in, out).
    k1, k2 = jax.random.split(key)
    bound1 = 1.0 / np.sqrt(FC1_IN)
    bound2 = 1.0 / np.sqrt(FC1_OUT)
    w1 = jax.random.uniform(k1, (FC1_IN, FC1_OUT), jnp.float32, -bound1, bound1)
    b1 = jnp.zeros((FC1_OUT,), jnp.float32)
    w2 = jax.random.uniform(k2, (FC1_OUT, class_num), jnp.float32, -bound2, bound2)
    b2 = jnp.zeros((class_num,), jnp.float32)
    return w1, b1, w2, b2


def reference_head(x_nchw, w1, b1, w2, b2):
    # pure-JAX f32 reference: avg_pool(7) -> view(-1, 864) -> fc1 -> fc2
    pooled = jnp.mean(x_nchw.astype(jnp.float32), axis=(2, 3))
    h = pooled @ w1 + b1
    return h @ w2 + b2


if __name__ == "__main__":
    class_num = 10
    # droprate_fc == 0.0 -> the `if droprate_fc > 0` dropout branch is not taken.

    key = jax.random.PRNGKey(0)
    kx, kp, kb = jax.random.split(key, 3)
    w1, b1, w2, b2 = init_head_params(kp, class_num)

    # ---- small-batch (latency) path: f32, sublane-reduce pooling -------------
    x_small = jax.random.normal(kx, (2, FC1_IN, POOL_HW, POOL_HW), jnp.float32)
    out_small = jax.block_until_ready(
        micronet_m2_head(x_small, w1, b1, w2, b2, droprate_fc=0.0))
    ref_small = reference_head(x_small, w1, b1, w2, b2)
    np.testing.assert_allclose(np.asarray(out_small), np.asarray(ref_small),
                               rtol=1e-3, atol=1e-3)

    # ---- large-batch (throughput) path: pooling folded into the MXU ----------
    x_large = jax.random.normal(kb, (128, FC1_IN, POOL_HW, POOL_HW), jnp.float32)
    out_large = jax.block_until_ready(
        micronet_m2_head(x_large, w1, b1, w2, b2, droprate_fc=0.0, batch_tile=64))
    ref_large = reference_head(x_large, w1, b1, w2, b2)
    # bf16 x / repeated weight (f32 MXU accumulation) -> looser tolerance.
    np.testing.assert_allclose(np.asarray(out_large), np.asarray(ref_large),
                               rtol=5e-2, atol=1e-2)

    print("KERNEL_OK")
</pallas_src>

<mosaic_0001>
module attributes {stable_mosaic.version = 11 : i64} {
  func.func @head_kernel_small(%arg0: i32, %arg1: memref<2x49x864xf32, #tpu.memory_space<vmem>>, %arg2: memref<864x128xf32, #tpu.memory_space<vmem>>, %arg3: memref<1x128xf32, #tpu.memory_space<vmem>>, %arg4: memref<2x128xf32, #tpu.memory_space<vmem>>) attributes {dimension_semantics = [#tpu.dimension_semantics<arbitrary>], iteration_bounds = array<i64: 1>, scalar_prefetch = 0 : i64, scratch_operands = 0 : i64, tpu.core_type = #tpu.core_type<tc>, window_params = [{pipeline_mode = #tpu.pipeline_mode<synchronous>, transform_indices = @transform_0, window_bounds = array<i64: 2, 49, 864>}, {pipeline_mode = #tpu.pipeline_mode<synchronous>, transform_indices = @transform_1, window_bounds = array<i64: 864, 128>}, {pipeline_mode = #tpu.pipeline_mode<synchronous>, transform_indices = @transform_2, window_bounds = array<i64: 1, 128>}, {pipeline_mode = #tpu.pipeline_mode<synchronous>, transform_indices = @transform_3, window_bounds = array<i64: 2, 128>}]} {
    %c0 = arith.constant 0 : index
    %c0_0 = arith.constant 0 : index
    %c0_1 = arith.constant 0 : index
    %0 = vector.load %arg1[%c0, %c0_0, %c0_1] : memref<2x49x864xf32, #tpu.memory_space<vmem>>, vector<2x49x864xf32>
    %cst = arith.constant dense<0.000000e+00> : vector<2x864xf32>
    %1 = vector.multi_reduction <add>, %0, %cst [1] : vector<2x49x864xf32> to vector<2x864xf32>
    %c0_2 = arith.constant 0 : index
    %c0_3 = arith.constant 0 : index
    %2 = vector.load %arg2[%c0_2, %c0_3] : memref<864x128xf32, #tpu.memory_space<vmem>>, vector<864x128xf32>
    %cst_4 = arith.constant dense<0.000000e+00> : vector<2x128xf32>
    %3 = tpu.matmul %1, %2, %cst_4 {dimension_numbers = #tpu.dot_dimension_numbers<[1], [0], [0], [1], [0, 0, 1, 1], [], []>} : vector<2x864xf32>, vector<864x128xf32>, vector<2x128xf32> -> vector<2x128xf32>
    %c0_5 = arith.constant 0 : index
    %c0_6 = arith.constant 0 : index
    %4 = vector.load %arg3[%c0_5, %c0_6] : memref<1x128xf32, #tpu.memory_space<vmem>>, vector<1x128xf32>
    %5 = vector.broadcast %4 : vector<1x128xf32> to vector<2x128xf32>
    %6 = arith.addf %3, %5 : vector<2x128xf32>
    %c0_7 = arith.constant 0 : index
    %c0_8 = arith.constant 0 : index
    %7 = vector.load %arg4[%c0_7, %c0_8] : memref<2x128xf32, #tpu.memory_space<vmem>>, vector<2x128xf32>
    tpu.vector_store %arg4[%c0_7, %c0_8], %6 {strides = array<i32>} : memref<2x128xf32, #tpu.memory_space<vmem>>, vector<2x128xf32>,
    return
  }
  func.func @transform_0(%arg0: i32) -> (i32, i32, i32) {
    %c0_i32 = arith.constant 0 : i32
    %c0_i32_0 = arith.constant 0 : i32
    %c0_i32_1 = arith.constant 0 : i32
    %c0_i32_2 = arith.constant 0 : i32
    return %c0_i32, %c0_i32_0, %c0_i32_1 : i32, i32, i32
  }
  func.func @transform_1(%arg0: i32) -> (i32, i32) {
    %c0_i32 = arith.constant 0 : i32
    %c0_i32_0 = arith.constant 0 : i32
    %c0_i32_1 = arith.constant 0 : i32
    return %c0_i32, %c0_i32_0 : i32, i32
  }
  func.func @transform_2(%arg0: i32) -> (i32, i32) {
    %c0_i32 = arith.constant 0 : i32
    %c0_i32_0 = arith.constant 0 : i32
    %c0_i32_1 = arith.constant 0 : i32
    return %c0_i32, %c0_i32_0 : i32, i32
  }
  func.func @transform_3(%arg0: i32) -> (i32, i32) {
    %c0_i32 = arith.constant 0 : i32
    %c0_i32_0 = arith.constant 0 : i32
    %c0_i32_1 = arith.constant 0 : i32
    return %c0_i32, %c0_i32_0 : i32, i32
  }
}

</mosaic_0001>

<llo_original>
// kernel: tpu_custom_call.1
$region0: #{tpu_custom_call.1}
  #allocation0 [shape = 'u32[]', space=smem, size = 0x4, offset = 0x4, fixed_abs, tag = 'smem constant byte address 0x4 - core index']
  #allocation1 [shape = 'u32[144,128]{1,0:T(1,128)}', space=vmem, size = 0x12000, scoped, tag = 'internal scratch']
  %s0 = inlined_call_operand.vmem [shape: f32[2,49,864], index: 0, kind: input, shape index: {}]
  %s1 = inlined_call_operand.vmem [shape: f32[864,128], index: 1, kind: input, shape index: {}]
  %s2 = inlined_call_operand.vmem [shape: f32[1,128], index: 2, kind: input, shape index: {}]
  %s3 = inlined_call_operand.hbm [shape: f32[2,128], index: 3, kind: output, shape index: {}]
  %s4 = sld [smem:[#allocation0]]
  $region22: #{tpu_custom_call.1} parent=0
    _
  %s6 = ssub.s32 1, %s4
  %s7 = scalar_select 0, %s6, %s4
  $region1: #{tpu_custom_call.1} parent=0
    #allocation2 [shape = 'u8[1024]{0}', space=vmem, size = 0x400, scoped, tag = 'output window, operand 0, single buffered']
    #allocation3 [shape = 's32[1]{0}', space=sflag, size = 0x4, scoped, tag = 'scoped memory for tpu_custom_call.1']
    %8 = vsyncpa [#allocation3], 0
    // Predicated region
    $region2: #{tpu_custom_call.1} parent=1 // pred_check
      _
    $region3: #{tpu_custom_call.1} parent=1 // pred_check_branch
      %10 = sbr.rel (0) target = $region5
    $region4: #{tpu_custom_call.1} parent=1 // pred_region
      _
    $region5: #{tpu_custom_call.1} parent=1 // pred_fallthru
      _
    // Predicated region
    $region6: #{tpu_custom_call.1} parent=1 // pred_check
      _
    $region7: #{tpu_custom_call.1} parent=1 // pred_check_branch
      %12 = sbr.rel (0) target = $region9
    $region8: #{tpu_custom_call.1} parent=1 // pred_region
      _
    $region9: #{tpu_custom_call.1} parent=1 // pred_fallthru
      _
    // Predicated region
    $region10: #{tpu_custom_call.1} parent=1 // pred_check
      _
    $region11: #{tpu_custom_call.1} parent=1 // pred_check_branch
      %14 = sbr.rel (0) target = $region13
    $region12: #{tpu_custom_call.1} parent=1 // pred_region
      _
    $region13: #{tpu_custom_call.1} parent=1 // pred_fallthru
      _
    %v15 = vld [vmem:[%s0] sm:$0xff]
    %v16 = vld [vmem:[%s0 + $0x8] sm:$0xff]
    %v17 = vld [vmem:[%s0 + $0x10] sm:$0xff]
    %v18 = vld [vmem:[%s0 + $0x18] sm:$0xff]
    %v19 = vld [vmem:[%s0 + $0x20] sm:$0xff]
    %v20 = vld [vmem:[%s0 + $0x28] sm:$0xff]
    %v21 = vld [vmem:[%s0 + $0x30] sm:$0xff]
    %v22 = vld [vmem:[%s0 + $0x38] sm:$0xff]
    %v23 = vld [vmem:[%s0 + $0x40] sm:$0xff]
    %v24 = vld [vmem:[%s0 + $0x48] sm:$0xff]
    %v25 = vld [vmem:[%s0 + $0x50] sm:$0xff]
    %v26 = vld [vmem:[%s0 + $0x58] sm:$0xff]
    %v27 = vld [vmem:[%s0 + $0x60] sm:$0xff]
    %v28 = vld [vmem:[%s0 + $0x68] sm:$0xff]
    %v29 = vld [vmem:[%s0 + $0x70] sm:$0xff]
    %v30 = vld [vmem:[%s0 + $0x78] sm:$0xff]
    %v31 = vld [vmem:[%s0 + $0x80] sm:$0xff]
    %v32 = vld [vmem:[%s0 + $0x88] sm:$0xff]
    %v33 = vld [vmem:[%s0 + $0x90] sm:$0xff]
    %v34 = vld [vmem:[%s0 + $0x98] sm:$0xff]
    %v35 = vld [vmem:[%s0 + $0xa0] sm:$0xff]
    %v36 = vld [vmem:[%s0 + $0xa8] sm:$0xff]
    %v37 = vld [vmem:[%s0 + $0xb0] sm:$0xff]
    %v38 = vld [vmem:[%s0 + $0xb8] sm:$0xff]
    %v39 = vld [vmem:[%s0 + $0xc0] sm:$0xff]
    %v40 = vld [vmem:[%s0 + $0xc8] sm:$0xff]
    %v41 = vld [vmem:[%s0 + $0xd0] sm:$0xff]
    %v42 = vld [vmem:[%s0 + $0xd8] sm:$0xff]
    %v43 = vld [vmem:[%s0 + $0xe0] sm:$0xff]
    %v44 = vld [vmem:[%s0 + $0xe8] sm:$0xff]
    %v45 = vld [vmem:[%s0 + $0xf0] sm:$0xff]
    %v46 = vld [vmem:[%s0 + $0xf8] sm:$0xff]
    %v47 = vld [vmem:[%s0 + $0x100] sm:$0xff]
    %v48 = vld [vmem:[%s0 + $0x108] sm:$0xff]
    %v49 = vld [vmem:[%s0 + $0x110] sm:$0xff]
    %v50 = vld [vmem:[%s0 + $0x118] sm:$0xff]
    %v51 = vld [vmem:[%s0 + $0x120] sm:$0xff]
    %v52 = vld [vmem:[%s0 + $0x128] sm:$0xff]
    %v53 = vld [vmem:[%s0 + $0x130] sm:$0xff]
    %v54 = vld [vmem:[%s0 + $0x138] sm:$0xff]
    %v55 = vld [vmem:[%s0 + $0x140] sm:$0xff]
    %v56 = vld [vmem:[%s0 + $0x148] sm:$0xff]
    %v57 = vld [vmem:[%s0 + $0x150] sm:$0x1]
    %v58 = vld [vmem:[%s0 + $0x158] sm:$0x1]
    %v59 = vld [vmem:[%s0 + $0x160] sm:$0x1]
    %v60 = vld [vmem:[%s0 + $0x168] sm:$0x1]
    %v61 = vld [vmem:[%s0 + $0x170] sm:$0x1]
    %v62 = vld [vmem:[%s0 + $0x178] sm:$0x1]
    %v63 = vld [vmem:[%s0 + $0x180] sm:$0x1]
    %v64 = vld [vmem:[%s0 + $0x188] sm:$0xff]
    %v65 = vld [vmem:[%s0 + $0x190] sm:$0xff]
    %v66 = vld [vmem:[%s0 + $0x198] sm:$0xff]
    %v67 = vld [vmem:[%s0 + $0x1a0] sm:$0xff]
    %v68 = vld [vmem:[%s0 + $0x1a8] sm:$0xff]
    %v69 = vld [vmem:[%s0 + $0x1b0] sm:$0xff]
    %v70 = vld [vmem:[%s0 + $0x1b8] sm:$0xff]
    %v71 = vld [vmem:[%s0 + $0x1c0] sm:$0xff]
    %v72 = vld [vmem:[%s0 + $0x1c8] sm:$0xff]
    %v73 = vld [vmem:[%s0 + $0x1d0] sm:$0xff]
    %v74 = vld [vmem:[%s0 + $0x1d8] sm:$0xff]
    %v75 = vld [vmem:[%s0 + $0x1e0] sm:$0xff]
    %v76 = vld [vmem:[%s0 + $0x1e8] sm:$0xff]
    %v77 = vld [vmem:[%s0 + $0x1f0] sm:$0xff]
    %v78 = vld [vmem:[%s0 + $0x1f8] sm:$0xff]
    %v79 = vld [vmem:[%s0 + $0x200] sm:$0xff]
    %v80 = vld [vmem:[%s0 + $0x208] sm:$0xff]
    %v81 = vld [vmem:[%s0 + $0x210] sm:$0xff]
    %v82 = vld [vmem:[%s0 + $0x218] sm:$0xff]
    %v83 = vld [vmem:[%s0 + $0x220] sm:$0xff]
    %v84 = vld [vmem:[%s0 + $0x228] sm:$0xff]
    %v85 = vld [vmem:[%s0 + $0x230] sm:$0xff]
    %v86 = vld [vmem:[%s0 + $0x238] sm:$0xff]
    %v87 = vld [vmem:[%s0 + $0x240] sm:$0xff]
    %v88 = vld [vmem:[%s0 + $0x248] sm:$0xff]
    %v89 = vld [vmem:[%s0 + $0x250] sm:$0xff]
    %v90 = vld [vmem:[%s0 + $0x258] sm:$0xff]
    %v91 = vld [vmem:[%s0 + $0x260] sm:$0xff]
    %v92 = vld [vmem:[%s0 + $0x268] sm:$0xff]
    %v93 = vld [vmem:[%s0 + $0x270] sm:$0xff]
    %v94 = vld [vmem:[%s0 + $0x278] sm:$0xff]
    %v95 = vld [vmem:[%s0 + $0x280] sm:$0xff]
    %v96 = vld [vmem:[%s0 + $0x288] sm:$0xff]
    %v97 = vld [vmem:[%s0 + $0x290] sm:$0xff]
    %v98 = vld [vmem:[%s0 + $0x298] sm:$0xff]
    %v99 = vld [vmem:[%s0 + $0x2a0] sm:$0xff]
    %v100 = vld [vmem:[%s0 + $0x2a8] sm:$0xff]
    %v101 = vld [vmem:[%s0 + $0x2b0] sm:$0xff]
    %v102 = vld [vmem:[%s0 + $0x2b8] sm:$0xff]
    %v103 = vld [vmem:[%s0 + $0x2c0] sm:$0xff]
    %v104 = vld [vmem:[%s0 + $0x2c8] sm:$0xff]
    %v105 = vld [vmem:[%s0 + $0x2d0] sm:$0xff]
    %v106 = vld [vmem:[%s0 + $0x2d8] sm:$0x1]
    %v107 = vld [vmem:[%s0 + $0x2e0] sm:$0x1]
    %v108 = vld [vmem:[%s0 + $0x2e8] sm:$0x1]
    %v109 = vld [vmem:[%s0 + $0x2f0] sm:$0x1]
    %v110 = vld [vmem:[%s0 + $0x2f8] sm:$0x1]
    %v111 = vld [vmem:[%s0 + $0x300] sm:$0x1]
    %v112 = vld [vmem:[%s0 + $0x308] sm:$0x1]
    %v113 = vadd.f32 %v15, %v22
    %v114 = vadd.f32 %v113, %v29
    %v115 = vadd.f32 %v114, %v36
    %v116 = vadd.f32 %v115, %v43
    %v117 = vadd.f32 %v116, %v50
    %vm118 = vcmask 1040384
    %v119 = vsel %vm118, %v57, 0.0
    %v120 = vadd.f32 %v117, %v119
    %v121 = vrot.slane %v120, 4
    %v122 = vadd.f32 %v120, %v121
    %v123 = vrot.slane %v122, 2
    %v124 = vadd.f32 %v122, %v123
    %v125 = vrot.slane %v124, 1
    %v126 = vadd.f32 %v124, %v125
    %v127 = vadd.f32 %v16, %v23
    %v128 = vadd.f32 %v127, %v30
    %v129 = vadd.f32 %v128, %v37
    %v130 = vadd.f32 %v129, %v44
    %v131 = vadd.f32 %v130, %v51
    %v132 = vsel %vm118, %v58, 0.0
    %v133 = vadd.f32 %v131, %v132
    %v134 = vrot.slane %v133, 4
    %v135 = vadd.f32 %v133, %v134
    %v136 = vrot.slane %v135, 2
    %v137 = vadd.f32 %v135, %v136
    %v138 = vrot.slane %v137, 1
    %v139 = vadd.f32 %v137, %v138
    %v140 = vadd.f32 %v17, %v24
    %v141 = vadd.f32 %v140, %v31
    %v142 = vadd.f32 %v141, %v38
    %v143 = vadd.f32 %v142, %v45
    %v144 = vadd.f32 %v143, %v52
    %v145 = vsel %vm118, %v59, 0.0
    %v146 = vadd.f32 %v144, %v145
    %v147 = vrot.slane %v146, 4
    %v148 = vadd.f32 %v146, %v147
    %v149 = vrot.slane %v148, 2
    %v150 = vadd.f32 %v148, %v149
    %v151 = vrot.slane %v150, 1
    %v152 = vadd.f32 %v150, %v151
    %v153 = vadd.f32 %v18, %v25
    %v154 = vadd.f32 %v153, %v32
    %v155 = vadd.f32 %v154, %v39
    %v156 = vadd.f32 %v155, %v46
    %v157 = vadd.f32 %v156, %v53
    %v158 = vsel %vm118, %v60, 0.0
    %v159 = vadd.f32 %v157, %v158
    %v160 = vrot.slane %v159, 4
    %v161 = vadd.f32 %v159, %v160
    %v162 = vrot.slane %v161, 2
    %v163 = vadd.f32 %v161, %v162
    %v164 = vrot.slane %v163, 1
    %v165 = vadd.f32 %v163, %v164
    %v166 = vadd.f32 %v19, %v26
    %v167 = vadd.f32 %v166, %v33
    %v168 = vadd.f32 %v167, %v40
    %v169 = vadd.f32 %v168, %v47
    %v170 = vadd.f32 %v169, %v54
    %v171 = vsel %vm118, %v61, 0.0
    %v172 = vadd.f32 %v170, %v171
    %v173 = vrot.slane %v172, 4
    %v174 = vadd.f32 %v172, %v173
    %v175 = vrot.slane %v174, 2
    %v176 = vadd.f32 %v174, %v175
    %v177 = vrot.slane %v176, 1
    %v178 = vadd.f32 %v176, %v177
    %v179 = vadd.f32 %v20, %v27
    %v180 = vadd.f32 %v179, %v34
    %v181 = vadd.f32 %v180, %v41
    %v182 = vadd.f32 %v181, %v48
    %v183 = vadd.f32 %v182, %v55
    %v184 = vsel %vm118, %v62, 0.0
    %v185 = vadd.f32 %v183, %v184
    %v186 = vrot.slane %v185, 4
    %v187 = vadd.f32 %v185, %v186
    %v188 = vrot.slane %v187, 2
    %v189 = vadd.f32 %v187, %v188
    %v190 = vrot.slane %v189, 1
    %v191 = vadd.f32 %v189, %v190
    %vm192 = vcmask 785408
    %v193 = vsel %vm192, %v21, 0.0
    %v194 = vsel %vm192, %v28, 0.0
    %v195 = vadd.f32 %v193, %v194
    %v196 = vsel %vm192, %v35, 0.0
    %v197 = vadd.f32 %v195, %v196
    %v198 = vsel %vm192, %v42, 0.0
    %v199 = vadd.f32 %v197, %v198
    %v200 = vsel %vm192, %v49, 0.0
    %v201 = vadd.f32 %v199, %v200
    %v202 = vsel %vm192, %v56, 0.0
    %v203 = vadd.f32 %v201, %v202
    %vm204 = vcmask 778240
    %v205 = vsel %vm204, %v63, 0.0
    %v206 = vadd.f32 %v203, %v205
    %v207 = vrot.slane %v206, 4
    %v208 = vadd.f32 %v206, %v207
    %v209 = vrot.slane %v208, 2
    %v210 = vadd.f32 %v208, %v209
    %v211 = vrot.slane %v210, 1
    %v212 = vadd.f32 %v210, %v211
    %v213 = vadd.f32 %v64, %v71
    %v214 = vadd.f32 %v213, %v78
    %v215 = vadd.f32 %v214, %v85
    %v216 = vadd.f32 %v215, %v92
    %v217 = vadd.f32 %v216, %v99
    %v218 = vsel %vm118, %v106, 0.0
    %v219 = vadd.f32 %v217, %v218
    %v220 = vrot.slane %v219, 4
    %v221 = vadd.f32 %v219, %v220
    %v222 = vrot.slane %v221, 2
    %v223 = vadd.f32 %v221, %v222
    %v224 = vrot.slane %v223, 1
    %v225 = vadd.f32 %v223, %v224
    %v226 = vadd.f32 %v65, %v72
    %v227 = vadd.f32 %v226, %v79
    %v228 = vadd.f32 %v227, %v86
    %v229 = vadd.f32 %v228, %v93
    %v230 = vadd.f32 %v229, %v100
    %v231 = vsel %vm118, %v107, 0.0
    %v232 = vadd.f32 %v230, %v231
    %v233 = vrot.slane %v232, 4
    %v234 = vadd.f32 %v232, %v233
    %v235 = vrot.slane %v234, 2
    %v236 = vadd.f32 %v234, %v235
    %v237 = vrot.slane %v236, 1
    %v238 = vadd.f32 %v236, %v237
    %v239 = vadd.f32 %v66, %v73
    %v240 = vadd.f32 %v239, %v80
    %v241 = vadd.f32 %v240, %v87
    %v242 = vadd.f32 %v241, %v94
    %v243 = vadd.f32 %v242, %v101
    %v244 = vsel %vm118, %v108, 0.0
    %v245 = vadd.f32 %v243, %v244
    %v246 = vrot.slane %v245, 4
    %v247 = vadd.f32 %v245, %v246
    %v248 = vrot.slane %v247, 2
    %v249 = vadd.f32 %v247, %v248
    %v250 = vrot.slane %v249, 1
    %v251 = vadd.f32 %v249, %v250
    %v252 = vadd.f32 %v67, %v74
    %v253 = vadd.f32 %v252, %v81
    %v254 = vadd.f32 %v253, %v88
    %v255 = vadd.f32 %v254, %v95
    %v256 = vadd.f32 %v255, %v102
    %v257 = vsel %vm118, %v109, 0.0
    %v258 = vadd.f32 %v256, %v257
    %v259 = vrot.slane %v258, 4
    %v260 = vadd.f32 %v258, %v259
    %v261 = vrot.slane %v260, 2
    %v262 = vadd.f32 %v260, %v261
    %v263 = vrot.slane %v262, 1
    %v264 = vadd.f32 %v262, %v263
    %v265 = vadd.f32 %v68, %v75
    %v266 = vadd.f32 %v265, %v82
    %v267 = vadd.f32 %v266, %v89
    %v268 = vadd.f32 %v267, %v96
    %v269 = vadd.f32 %v268, %v103
    %v270 = vsel %vm118, %v110, 0.0
    %v271 = vadd.f32 %v269, %v270
    %v272 = vrot.slane %v271, 4
    %v273 = vadd.f32 %v271, %v272
    %v274 = vrot.slane %v273, 2
    %v275 = vadd.f32 %v273, %v274
    %v276 = vrot.slane %v275, 1
    %v277 = vadd.f32 %v275, %v276
    %v278 = vadd.f32 %v69, %v76
    %v279 = vadd.f32 %v278, %v83
    %v280 = vadd.f32 %v279, %v90
    %v281 = vadd.f32 %v280, %v97
    %v282 = vadd.f32 %v281, %v104
    %v283 = vsel %vm118, %v111, 0.0
    %v284 = vadd.f32 %v282, %v283
    %v285 = vrot.slane %v284, 4
    %v286 = vadd.f32 %v284, %v285
    %v287 = vrot.slane %v286, 2
    %v288 = vadd.f32 %v286, %v287
    %v289 = vrot.slane %v288, 1
    %v290 = vadd.f32 %v288, %v289
    %v291 = vsel %vm192, %v70, 0.0
    %v292 = vsel %vm192, %v77, 0.0
    %v293 = vadd.f32 %v291, %v292
    %v294 = vsel %vm192, %v84, 0.0
    %v295 = vadd.f32 %v293, %v294
    %v296 = vsel %vm192, %v91, 0.0
    %v297 = vadd.f32 %v295, %v296
    %v298 = vsel %vm192, %v98, 0.0
    %v299 = vadd.f32 %v297, %v298
    %v300 = vsel %vm192, %v105, 0.0
    %v301 = vadd.f32 %v299, %v300
    %v302 = vsel %vm204, %v112, 0.0
    %v303 = vadd.f32 %v301, %v302
    %v304 = vrot.slane %v303, 4
    %v305 = vadd.f32 %v303, %v304
    %v306 = vrot.slane %v305, 2
    %v307 = vadd.f32 %v305, %v306
    %v308 = vrot.slane %v307, 1
    %v309 = vadd.f32 %v307, %v308
    %v310 = vld [vmem:[%s1] sm:$0xff]
    %v311 = vld [vmem:[%s1 + $0x8] sm:$0xff]
    %v312 = vld [vmem:[%s1 + $0x10] sm:$0xff]
    %v313 = vld [vmem:[%s1 + $0x18] sm:$0xff]
    %v314 = vld [vmem:[%s1 + $0x20] sm:$0xff]
    %v315 = vld [vmem:[%s1 + $0x28] sm:$0xff]
    %v316 = vld [vmem:[%s1 + $0x30] sm:$0xff]
    %v317 = vld [vmem:[%s1 + $0x38] sm:$0xff]
    %v318 = vld [vmem:[%s1 + $0x40] sm:$0xff]
    %v319 = vld [vmem:[%s1 + $0x48] sm:$0xff]
    %v320 = vld [vmem:[%s1 + $0x50] sm:$0xff]
    %v321 = vld [vmem:[%s1 + $0x58] sm:$0xff]
    %v322 = vld [vmem:[%s1 + $0x60] sm:$0xff]
    %v323 = vld [vmem:[%s1 + $0x68] sm:$0xff]
    %v324 = vld [vmem:[%s1 + $0x70] sm:$0xff]
    %v325 = vld [vmem:[%s1 + $0x78] sm:$0xff]
    %v326 = vld [vmem:[%s1 + $0x80] sm:$0xff]
    %v327 = vld [vmem:[%s1 + $0x88] sm:$0xff]
    %v328 = vld [vmem:[%s1 + $0x90] sm:$0xff]
    %v329 = vld [vmem:[%s1 + $0x98] sm:$0xff]
    %v330 = vld [vmem:[%s1 + $0xa0] sm:$0xff]
    %v331 = vld [vmem:[%s1 + $0xa8] sm:$0xff]
    %v332 = vld [vmem:[%s1 + $0xb0] sm:$0xff]
    %v333 = vld [vmem:[%s1 + $0xb8] sm:$0xff]
    %v334 = vld [vmem:[%s1 + $0xc0] sm:$0xff]
    %v335 = vld [vmem:[%s1 + $0xc8] sm:$0xff]
    %v336 = vld [vmem:[%s1 + $0xd0] sm:$0xff]
    %v337 = vld [vmem:[%s1 + $0xd8] sm:$0xff]
    %v338 = vld [vmem:[%s1 + $0xe0] sm:$0xff]
    %v339 = vld [vmem:[%s1 + $0xe8] sm:$0xff]
    %v340 = vld [vmem:[%s1 + $0xf0] sm:$0xff]
    %v341 = vld [vmem:[%s1 + $0xf8] sm:$0xff]
    %v342 = vld [vmem:[%s1 + $0x100] sm:$0xff]
    %v343 = vld [vmem:[%s1 + $0x108] sm:$0xff]
    %v344 = vld [vmem:[%s1 + $0x110] sm:$0xff]
    %v345 = vld [vmem:[%s1 + $0x118] sm:$0xff]
    %v346 = vld [vmem:[%s1 + $0x120] sm:$0xff]
    %v347 = vld [vmem:[%s1 + $0x128] sm:$0xff]
    %v348 = vld [vmem:[%s1 + $0x130] sm:$0xff]
    %v349 = vld [vmem:[%s1 + $0x138] sm:$0xff]
    %v350 = vld [vmem:[%s1 + $0x140] sm:$0xff]
    %v351 = vld [vmem:[%s1 + $0x148] sm:$0xff]
    %v352 = vld [vmem:[%s1 + $0x150] sm:$0xff]
    %v353 = vld [vmem:[%s1 + $0x158] sm:$0xff]
    %v354 = vld [vmem:[%s1 + $0x160] sm:$0xff]
    %v355 = vld [vmem:[%s1 + $0x168] sm:$0xff]
    %v356 = vld [vmem:[%s1 + $0x170] sm:$0xff]
    %v357 = vld [vmem:[%s1 + $0x178] sm:$0xff]
    %v358 = vld [vmem:[%s1 + $0x180] sm:$0xff]
    %v359 = vld [vmem:[%s1 + $0x188] sm:$0xff]
    %v360 = vld [vmem:[%s1 + $0x190] sm:$0xff]
    %v361 = vld [vmem:[%s1 + $0x198] sm:$0xff]
    %v362 = vld [vmem:[%s1 + $0x1a0] sm:$0xff]
    %v363 = vld [vmem:[%s1 + $0x1a8] sm:$0xff]
    %v364 = vld [vmem:[%s1 + $0x1b0] sm:$0xff]
    %v365 = vld [vmem:[%s1 + $0x1b8] sm:$0xff]
    %v366 = vld [vmem:[%s1 + $0x1c0] sm:$0xff]
    %v367 = vld [vmem:[%s1 + $0x1c8] sm:$0xff]
    %v368 = vld [vmem:[%s1 + $0x1d0] sm:$0xff]
    %v369 = vld [vmem:[%s1 + $0x1d8] sm:$0xff]
    %v370 = vld [vmem:[%s1 + $0x1e0] sm:$0xff]
    %v371 = vld [vmem:[%s1 + $0x1e8] sm:$0xff]
    %v372 = vld [vmem:[%s1 + $0x1f0] sm:$0xff]
    %v373 = vld [vmem:[%s1 + $0x1f8] sm:$0xff]
    %v374 = vld [vmem:[%s1 + $0x200] sm:$0xff]
    %v375 = vld [vmem:[%s1 + $0x208] sm:$0xff]
    %v376 = vld [vmem:[%s1 + $0x210] sm:$0xff]
    %v377 = vld [vmem:[%s1 + $0x218] sm:$0xff]
    %v378 = vld [vmem:[%s1 + $0x220] sm:$0xff]
    %v379 = vld [vmem:[%s1 + $0x228] sm:$0xff]
    %v380 = vld [vmem:[%s1 + $0x230] sm:$0xff]
    %v381 = vld [vmem:[%s1 + $0x238] sm:$0xff]
    %v382 = vld [vmem:[%s1 + $0x240] sm:$0xff]
    %v383 = vld [vmem:[%s1 + $0x248] sm:$0xff]
    %v384 = vld [vmem:[%s1 + $0x250] sm:$0xff]
    %v385 = vld [vmem:[%s1 + $0x258] sm:$0xff]
    %v386 = vld [vmem:[%s1 + $0x260] sm:$0xff]
    %v387 = vld [vmem:[%s1 + $0x268] sm:$0xff]
    %v388 = vld [vmem:[%s1 + $0x270] sm:$0xff]
    %v389 = vld [vmem:[%s1 + $0x278] sm:$0xff]
    %v390 = vld [vmem:[%s1 + $0x280] sm:$0xff]
    %v391 = vld [vmem:[%s1 + $0x288] sm:$0xff]
    %v392 = vld [vmem:[%s1 + $0x290] sm:$0xff]
    %v393 = vld [vmem:[%s1 + $0x298] sm:$0xff]
    %v394 = vld [vmem:[%s1 + $0x2a0] sm:$0xff]
    %v395 = vld [vmem:[%s1 + $0x2a8] sm:$0xff]
    %v396 = vld [vmem:[%s1 + $0x2b0] sm:$0xff]
    %v397 = vld [vmem:[%s1 + $0x2b8] sm:$0xff]
    %v398 = vld [vmem:[%s1 + $0x2c0] sm:$0xff]
    %v399 = vld [vmem:[%s1 + $0x2c8] sm:$0xff]
    %v400 = vld [vmem:[%s1 + $0x2d0] sm:$0xff]
    %v401 = vld [vmem:[%s1 + $0x2d8] sm:$0xff]
    %v402 = vld [vmem:[%s1 + $0x2e0] sm:$0xff]
    %v403 = vld [vmem:[%s1 + $0x2e8] sm:$0xff]
    %v404 = vld [vmem:[%s1 + $0x2f0] sm:$0xff]
    %v405 = vld [vmem:[%s1 + $0x2f8] sm:$0xff]
    %v406 = vld [vmem:[%s1 + $0x300] sm:$0xff]
    %v407 = vld [vmem:[%s1 + $0x308] sm:$0xff]
    %v408 = vld [vmem:[%s1 + $0x310] sm:$0xff]
    %v409 = vld [vmem:[%s1 + $0x318] sm:$0xff]
    %v410 = vld [vmem:[%s1 + $0x320] sm:$0xff]
    %v411 = vld [vmem:[%s1 + $0x328] sm:$0xff]
    %v412 = vld [vmem:[%s1 + $0x330] sm:$0xff]
    %v413 = vld [vmem:[%s1 + $0x338] sm:$0xff]
    %v414 = vld [vmem:[%s1 + $0x340] sm:$0xff]
    %v415 = vld [vmem:[%s1 + $0x348] sm:$0xff]
    %v416 = vld [vmem:[%s1 + $0x350] sm:$0xff]
    %v417 = vld [vmem:[%s1 + $0x358] sm:$0xff]
    %v418 = vld [vmem:[%s2] sm:$0x1]
    %v420 = vlaneseq
    %v421 = vshrl.u32 %v420, 7
    %v422 = vsub.s32 0, %v421
    %v423 = vrot.slane %v418, %v422
    %vm439 = vcmask 1041409
    %v440 = vsel %vm439, %v225, %v126
    %v441 = vsel %vm439, %v238, %v139
    %v442 = vsel %vm439, %v251, %v152
    %v443 = vsel %vm439, %v264, %v165
    %v444 = vsel %vm439, %v277, %v178
    %v445 = vsel %vm439, %v290, %v191
    %v446 = vsel %vm439, %v309, %v212
    %v453 = vsel %vm192, %v446, 0
    %455 = vmatprep.subr.mxu0 0.0
    %456 = vmatpush1.msra.mxu0 %v310
    %457 = vmatprep.subr.mxu0 0.0
    %458 = vmatpush1.msra.mxu0 %v311
    %459 = vmatprep.subr.mxu0 0.0
    %460 = vmatpush1.msra.mxu0 %v312
    %461 = vmatprep.subr.mxu0 0.0
    %462 = vmatpush1.msra.mxu0 %v313
    %463 = vmatprep.subr.mxu0 0.0
    %464 = vmatpush1.msra.mxu0 %v314
    %465 = vmatprep.subr.mxu0 0.0
    %466 = vmatpush1.msra.mxu0 %v315
    %467 = vmatprep.subr.mxu0 0.0
    %468 = vmatpush1.msra.mxu0 %v316
    %469 = vmatprep.subr.mxu0 0.0
    %470 = vmatpush1.msra.mxu0 %v317
    %471 = vmatprep.subr.mxu0 0.0
    %472 = vmatpush1.msra.mxu0 %v318
    %473 = vmatprep.subr.mxu0 0.0
    %474 = vmatpush1.msra.mxu0 %v319
    %475 = vmatprep.subr.mxu0 0.0
    %476 = vmatpush1.msra.mxu0 %v320
    %477 = vmatprep.subr.mxu0 0.0
    %478 = vmatpush1.msra.mxu0 %v321
    %479 = vmatprep.subr.mxu0 0.0
    %480 = vmatpush1.msra.mxu0 %v322
    %481 = vmatprep.subr.mxu0 0.0
    %482 = vmatpush1.msra.mxu0 %v323
    %483 = vmatprep.subr.mxu0 0.0
    %484 = vmatpush1.msra.mxu0 %v324
    %485 = vmatprep.subr.mxu0 0.0
    %486 = vmatpush1.msra.mxu0 %v325
    %487 = vmatprep.subr.mxu0 0.0
    %488 = vmatpush1.msra.mxu0 %v326
    %489 = vmatprep.subr.mxu0 0.0
    %490 = vmatpush1.msra.mxu0 %v327
    %491 = vmatprep.subr.mxu0 0.0
    %492 = vmatpush1.msra.mxu0 %v328
    %493 = vmatprep.subr.mxu0 0.0
    %494 = vmatpush1.msra.mxu0 %v329
    %495 = vmatprep.subr.mxu0 0.0
    %496 = vmatpush1.msra.mxu0 %v330
    %497 = vmatprep.subr.mxu0 0.0
    %498 = vmatpush1.msra.mxu0 %v331
    %499 = vmatprep.subr.mxu0 0.0
    %500 = vmatpush1.msra.mxu0 %v332
    %501 = vmatprep.subr.mxu0 0.0
    %502 = vmatpush1.msra.mxu0 %v333
    %503 = vmatprep.subr.mxu0 0.0
    %504 = vmatpush1.msra.mxu0 %v334
    %505 = vmatprep.subr.mxu0 0.0
    %506 = vmatpush1.msra.mxu0 %v335
    %507 = vmatprep.subr.mxu0 0.0
    %508 = vmatpush1.msra.mxu0 %v336
    %509 = vmatprep.subr.mxu0 0.0
    %510 = vmatpush1.msra.mxu0 %v337
    %511 = vmatprep.subr.mxu0 0.0
    %512 = vmatpush1.msra.mxu0 %v338
    %513 = vmatprep.subr.mxu0 0.0
    %514 = vmatpush1.msra.mxu0 %v339
    %515 = vmatprep.subr.mxu0 0.0
    %516 = vmatpush1.msra.mxu0 %v340
    %517 = vmatprep.subr.mxu0 0.0
    %518 = vmatpush1.msra.mxu0 %v341
    %519 = vmatprep.mubr.f32.mxu0 %v441
    %520 = vmatmul.mubr.f32.gmra.mrb[0].mxu0 %v440
    %v521 = vpop.f32.mrb[0].mxu0
    %v522 = vadd.f32 %v423, %v521
    %v523 = vpop.f32.mrb[0].mxu0
    %524 = vdwg.mxu0
    %525 = vmatprep.subr.mxu0 0.0
    %526 = vmatpush1.msra.mxu0 %v342
    %527 = vmatprep.subr.mxu0 0.0
    %528 = vmatpush1.msra.mxu0 %v343
    %529 = vmatprep.subr.mxu0 0.0
    %530 = vmatpush1.msra.mxu0 %v344
    %531 = vmatprep.subr.mxu0 0.0
    %532 = vmatpush1.msra.mxu0 %v345
    %533 = vmatprep.subr.mxu0 0.0
    %534 = vmatpush1.msra.mxu0 %v346
    %535 = vmatprep.subr.mxu0 0.0
    %536 = vmatpush1.msra.mxu0 %v347
    %537 = vmatprep.subr.mxu0 0.0
    %538 = vmatpush1.msra.mxu0 %v348
    %539 = vmatprep.subr.mxu0 0.0
    %540 = vmatpush1.msra.mxu0 %v349
    %541 = vmatprep.subr.mxu0 0.0
    %542 = vmatpush1.msra.mxu0 %v350
    %543 = vmatprep.subr.mxu0 0.0
    %544 = vmatpush1.msra.mxu0 %v351
    %545 = vmatprep.subr.mxu0 0.0
    %546 = vmatpush1.msra.mxu0 %v352
    %547 = vmatprep.subr.mxu0 0.0
    %548 = vmatpush1.msra.mxu0 %v353
    %549 = vmatprep.subr.mxu0 0.0
    %550 = vmatpush1.msra.mxu0 %v354
    %551 = vmatprep.subr.mxu0 0.0
    %552 = vmatpush1.msra.mxu0 %v355
    %553 = vmatprep.subr.mxu0 0.0
    %554 = vmatpush1.msra.mxu0 %v356
    %555 = vmatprep.subr.mxu0 0.0
    %556 = vmatpush1.msra.mxu0 %v357
    %557 = vmatprep.subr.mxu0 0.0
    %558 = vmatpush1.msra.mxu0 %v358
    %559 = vmatprep.subr.mxu0 0.0
    %560 = vmatpush1.msra.mxu0 %v359
    %561 = vmatprep.subr.mxu0 0.0
    %562 = vmatpush1.msra.mxu0 %v360
    %563 = vmatprep.subr.mxu0 0.0
    %564 = vmatpush1.msra.mxu0 %v361
    %565 = vmatprep.subr.mxu0 0.0
    %566 = vmatpush1.msra.mxu0 %v362
    %567 = vmatprep.subr.mxu0 0.0
    %568 = vmatpush1.msra.mxu0 %v363
    %569 = vmatprep.subr.mxu0 0.0
    %570 = vmatpush1.msra.mxu0 %v364
    %571 = vmatprep.subr.mxu0 0.0
    %572 = vmatpush1.msra.mxu0 %v365
    %573 = vmatprep.subr.mxu0 0.0
    %574 = vmatpush1.msra.mxu0 %v366
    %575 = vmatprep.subr.mxu0 0.0
    %576 = vmatpush1.msra.mxu0 %v367
    %577 = vmatprep.subr.mxu0 0.0
    %578 = vmatpush1.msra.mxu0 %v368
    %579 = vmatprep.subr.mxu0 0.0
    %580 = vmatpush1.msra.mxu0 %v369
    %581 = vmatprep.subr.mxu0 0.0
    %582 = vmatpush1.msra.mxu0 %v370
    %583 = vmatprep.subr.mxu0 0.0
    %584 = vmatpush1.msra.mxu0 %v371
    %585 = vmatprep.subr.mxu0 0.0
    %586 = vmatpush1.msra.mxu0 %v372
    %587 = vmatprep.subr.mxu0 0.0
    %588 = vmatpush1.msra.mxu0 %v373
    %589 = vmatprep.mubr.f32.mxu0 %v443
    %590 = vmatmul.mubr.f32.gmra.mrb[0].mxu0 %v442
    %v591 = vpop.f32.mrb[0].mxu0
    %v592 = vadd.f32 %v522, %v591
    %v593 = vpop.f32.mrb[0].mxu0
    %594 = vdwg.mxu0
    %595 = vmatprep.subr.mxu0 0.0
    %596 = vmatpush1.msra.mxu0 %v374
    %597 = vmatprep.subr.mxu0 0.0
    %598 = vmatpush1.msra.mxu0 %v375
    %599 = vmatprep.subr.mxu0 0.0
    %600 = vmatpush1.msra.mxu0 %v376
    %601 = vmatprep.subr.mxu0 0.0
    %602 = vmatpush1.msra.mxu0 %v377
    %603 = vmatprep.subr.mxu0 0.0
    %604 = vmatpush1.msra.mxu0 %v378
    %605 = vmatprep.subr.mxu0 0.0
    %606 = vmatpush1.msra.mxu0 %v379
    %607 = vmatprep.subr.mxu0 0.0
    %608 = vmatpush1.msra.mxu0 %v380
    %609 = vmatprep.subr.mxu0 0.0
    %610 = vmatpush1.msra.mxu0 %v381
    %611 = vmatprep.subr.mxu0 0.0
    %612 = vmatpush1.msra.mxu0 %v382
    %613 = vmatprep.subr.mxu0 0.0
    %614 = vmatpush1.msra.mxu0 %v383
    %615 = vmatprep.subr.mxu0 0.0
    %616 = vmatpush1.msra.mxu0 %v384
    %617 = vmatprep.subr.mxu0 0.0
    %618 = vmatpush1.msra.mxu0 %v385
    %619 = vmatprep.subr.mxu0 0.0
    %620 = vmatpush1.msra.mxu0 %v386
    %621 = vmatprep.subr.mxu0 0.0
    %622 = vmatpush1.msra.mxu0 %v387
    %623 = vmatprep.subr.mxu0 0.0
    %624 = vmatpush1.msra.mxu0 %v388
    %625 = vmatprep.subr.mxu0 0.0
    %626 = vmatpush1.msra.mxu0 %v389
    %627 = vmatprep.subr.mxu0 0.0
    %628 = vmatpush1.msra.mxu0 %v390
    %629 = vmatprep.subr.mxu0 0.0
    %630 = vmatpush1.msra.mxu0 %v391
    %631 = vmatprep.subr.mxu0 0.0
    %632 = vmatpush1.msra.mxu0 %v392
    %633 = vmatprep.subr.mxu0 0.0
    %634 = vmatpush1.msra.mxu0 %v393
    %635 = vmatprep.subr.mxu0 0.0
    %636 = vmatpush1.msra.mxu0 %v394
    %637 = vmatprep.subr.mxu0 0.0
    %638 = vmatpush1.msra.mxu0 %v395
    %639 = vmatprep.subr.mxu0 0.0
    %640 = vmatpush1.msra.mxu0 %v396
    %641 = vmatprep.subr.mxu0 0.0
    %642 = vmatpush1.msra.mxu0 %v397
    %643 = vmatprep.subr.mxu0 0.0
    %644 = vmatpush1.msra.mxu0 %v398
    %645 = vmatprep.subr.mxu0 0.0
    %646 = vmatpush1.msra.mxu0 %v399
    %647 = vmatprep.subr.mxu0 0.0
    %648 = vmatpush1.msra.mxu0 %v400
    %649 = vmatprep.subr.mxu0 0.0
    %650 = vmatpush1.msra.mxu0 %v401
    %651 = vmatprep.subr.mxu0 0.0
    %652 = vmatpush1.msra.mxu0 %v402
    %653 = vmatprep.subr.mxu0 0.0
    %654 = vmatpush1.msra.mxu0 %v403
    %655 = vmatprep.subr.mxu0 0.0
    %656 = vmatpush1.msra.mxu0 %v404
    %657 = vmatprep.subr.mxu0 0.0
    %658 = vmatpush1.msra.mxu0 %v405
    %659 = vmatprep.mubr.f32.mxu0 %v445
    %660 = vmatmul.mubr.f32.gmra.mrb[0].mxu0 %v444
    %v661 = vpop.f32.mrb[0].mxu0
    %v662 = vadd.f32 %v592, %v661
    %v663 = vpop.f32.mrb[0].mxu0
    %664 = vdwg.mxu0
    %665 = vmatprep.subr.mxu0 0.0
    %666 = vmatpush1.msra.mxu0 %v406
    %667 = vmatprep.subr.mxu0 0.0
    %668 = vmatpush1.msra.mxu0 %v407
    %669 = vmatprep.subr.mxu0 0.0
    %670 = vmatpush1.msra.mxu0 %v408
    %671 = vmatprep.subr.mxu0 0.0
    %672 = vmatpush1.msra.mxu0 %v409
    %673 = vmatprep.subr.mxu0 0.0
    %674 = vmatpush1.msra.mxu0 %v410
    %675 = vmatprep.subr.mxu0 0.0
    %676 = vmatpush1.msra.mxu0 %v411
    %677 = vmatprep.subr.mxu0 0.0
    %678 = vmatpush1.msra.mxu0 %v412
    %679 = vmatprep.subr.mxu0 0.0
    %680 = vmatpush1.msra.mxu0 %v413
    %681 = vmatprep.subr.mxu0 0.0
    %682 = vmatpush1.msra.mxu0 %v414
    %683 = vmatprep.subr.mxu0 0.0
    %684 = vmatpush1.msra.mxu0 %v415
    %685 = vmatprep.subr.mxu0 0.0
    %686 = vmatpush1.msra.mxu0 %v416
    %687 = vmatprep.subr.mxu0 0.0
    %688 = vmatpush1.msra.mxu0 %v417
    %689 = vmatprep.subr.mxu0 0.0
    %690 = vmatpush1.msra.mxu0 0.0
    %691 = vmatprep.subr.mxu0 0.0
    %692 = vmatpush1.msra.mxu0 0.0
    %693 = vmatprep.subr.mxu0 0.0
    %694 = vmatpush1.msra.mxu0 0.0
    %695 = vmatprep.subr.mxu0 0.0
    %696 = vmatpush1.msra.mxu0 0.0
    %697 = vmatprep.subr.mxu0 0.0
    %698 = vmatpush1.msra.mxu0 0.0
    %699 = vmatprep.subr.mxu0 0.0
    %700 = vmatpush1.msra.mxu0 0.0
    %701 = vmatprep.subr.mxu0 0.0
    %702 = vmatpush1.msra.mxu0 0.0
    %703 = vmatprep.subr.mxu0 0.0
    %704 = vmatpush1.msra.mxu0 0.0
    %705 = vmatprep.subr.mxu0 0.0
    %706 = vmatpush1.msra.mxu0 0.0
    %707 = vmatprep.subr.mxu0 0.0
    %708 = vmatpush1.msra.mxu0 0.0
    %709 = vmatprep.subr.mxu0 0.0
    %710 = vmatpush1.msra.mxu0 0.0
    %711 = vmatprep.subr.mxu0 0.0
    %712 = vmatpush1.msra.mxu0 0.0
    %713 = vmatprep.subr.mxu0 0.0
    %714 = vmatpush1.msra.mxu0 0.0
    %715 = vmatprep.subr.mxu0 0.0
    %716 = vmatpush1.msra.mxu0 0.0
    %717 = vmatprep.subr.mxu0 0.0
    %718 = vmatpush1.msra.mxu0 0.0
    %719 = vmatprep.subr.mxu0 0.0
    %720 = vmatpush1.msra.mxu0 0.0
    %721 = vmatprep.subr.mxu0 0.0
    %722 = vmatpush1.msra.mxu0 0.0
    %723 = vmatprep.subr.mxu0 0.0
    %724 = vmatpush1.msra.mxu0 0.0
    %725 = vmatprep.subr.mxu0 0.0
    %726 = vmatpush1.msra.mxu0 0.0
    %727 = vmatprep.subr.mxu0 0.0
    %728 = vmatpush1.msra.mxu0 0.0
    %729 = vmatprep.mubr.f32.mxu0 0.0
    %730 = vmatmul.mubr.f32.gmra.mrb[0].mxu0 %v453
    %v731 = vpop.f32.mrb[0].mxu0
    %v732 = vadd.f32 %v662, %v731
    %v733 = vpop.f32.mrb[0].mxu0
    %734 = vdwg.mxu0
    %735 = vst [vmem:[#allocation2] sm:$0x3] %v732
    // Predicated region
    $region14: #{tpu_custom_call.1} parent=1 // pred_check
      _
    $region15: #{tpu_custom_call.1} parent=1 // pred_check_branch
      %737 = sbr.rel (0) target = $region17
    $region16: #{tpu_custom_call.1} parent=1 // pred_region
      %s739 = ssub.s32 32, 32
      %740 = vsyncadd [#allocation3], %s739
      %s742 = sshll.u32 [#allocation2], 4
      %s743 = int_to_ptr.vmem [resolvable:$true] %s742
      %745 = dma.vmem_to_hbm [thread:$0]  %s743, 32, %s3, [#allocation3]
    $region17: #{tpu_custom_call.1} parent=1 // pred_fallthru
      _
    // Predicated region
    $region18: #{tpu_custom_call.1} parent=1 // pred_check
      _
    $region19: #{tpu_custom_call.1} parent=1 // pred_check_branch
      %747 = sbr.rel (0) target = $region21
    $region20: #{tpu_custom_call.1} parent=1 // pred_region
      %748 = dma.done [#allocation3], 32
    $region21: #{tpu_custom_call.1} parent=1 // pred_fallthru
      _
    %749 = vsyncpa [#allocation3], 1

</llo_original>
